<compile_context>
chip_gen: v5e
topology: v5e:2x2
jax: 0.10.0
libtpu: 0.0.40
codegen_flags: <defaults>
</compile_context>

<pallas_src>
import functools

import jax
import jax.numpy as jnp
from jax.experimental import pallas as pl
from jax.experimental.pallas import tpu as pltpu

NEG_SLOPE = 0.01      # PyTorch nn.LeakyReLU default
HID = 128             # hidden width of the 2-layer variant
LANE = 128


def _round_up(x, m):
    return ((x + m - 1) // m) * m


def _leaky_relu(x, slope=NEG_SLOPE):
    # identical to where(x>=0, x, slope*x) for 0 < slope < 1, but mul+max only
    return jnp.maximum(x, slope * x)


def _device_defaults():
    """(max batch-tile rows, scoped VMEM limit) per TPU generation."""
    try:
        cap = pltpu.get_tpu_info().vmem_capacity_bytes
    except Exception:  # no TPU / old jax: conservative values that fit everywhere
        return 8192, 40 << 20
    if cap >= (100 << 20):     # v5e / v6e: 128 MiB VMEM
        return 16384, 64 << 20
    return 8192, 40 << 20      # v7x: 64 MiB per TensorCore -> stay under ~40 MiB


_TB_MAX_DEFAULT, _VMEM_LIMIT_DEFAULT = _device_defaults()


def _pos_emb_kernel(x_ref, w1_ref, b1_ref, w2_ref, b2_ref, o_ref):
    # x: (TB, F_in), w1: (F_in, 128), b1: (1, 128), w2: (128, H), b2: (1, H)
    # Activations are cast to the weight dtype (bf16 weights => full-rate bf16
    # MXU on v6e/v7x); accumulation / bias / LeakyReLU stay f32.
    x = x_ref[...].astype(w1_ref.dtype)
    h = jnp.dot(x, w1_ref[...], preferred_element_type=jnp.float32)
    h = _leaky_relu(h + b1_ref[...].astype(jnp.float32))

    h = h.astype(w2_ref.dtype)
    y = jnp.dot(h, w2_ref[...], preferred_element_type=jnp.float32)
    y = _leaky_relu(y + b2_ref[...].astype(jnp.float32))

    o_ref[...] = y.astype(o_ref.dtype)
    # TODO(synk): if the vst slot binds on v5e (masked stores for H<128 plus the
    # (tb,128) f32 h/y VMEM round-trips), strip-mine the body over ~512-row
    # sub-chunks and/or pack the output lane-dense ((tb,H)->(tb*H/128,128)).
    # TODO(synk): on v7x, layer 1 (K=F_in<<128) could be F_in VPU broadcast-MACs
    # instead of an under-filled MXU pass — only if the bundle shows MXU binding.


@functools.partial(
    jax.jit,
    static_argnames=("block_b", "vmem_limit_bytes", "use_bf16_matmul", "out_dtype"))
def position_embedding_pallas(pose, w1, b1, w2, b2, *, block_b=None,
                              vmem_limit_bytes=None, use_bf16_matmul=False,
                              out_dtype=None):
    """pose: (B, F_in); w1: (F_in, 128); b1: (1, 128); w2: (128, H); b2: (1, H)."""
    B, F_in = pose.shape
    H = w2.shape[1]
    out_dtype = pose.dtype if out_dtype is None else out_dtype

    if use_bf16_matmul:
        # Weights are tiny; cast once wrapper-side. Biases stay in their dtype
        # (added in f32 inside the kernel).
        w1 = w1.astype(jnp.bfloat16)
        w2 = w2.astype(jnp.bfloat16)

    tb_max = _TB_MAX_DEFAULT if block_b is None else block_b
    vmem_limit = _VMEM_LIMIT_DEFAULT if vmem_limit_bytes is None else vmem_limit_bytes

    # Row alignment follows input packing: 8 rows/vreg for 4-byte, 16 for bf16.
    row_align = max(8, 32 // jnp.dtype(pose.dtype).itemsize)

    # Balanced batch tiling with NO wrapper-side padding of `pose`:
    #   tb = round_up(ceil(B / n_tiles), row_align); ragged last tile handled by
    #   the Pallas pipeline (clamped boundary DMAs, discarded OOB writes).
    # Keep grid >= 2 for large single-tile batches so the "parallel" axis can
    # shard across both TensorCores (v7x megacore).
    n_tiles = pl.cdiv(B, tb_max)
    if n_tiles == 1 and B >= 4096:
        n_tiles = 2
    tb = _round_up(pl.cdiv(B, n_tiles), row_align)
    grid = (pl.cdiv(B, tb),)

    def esz(a):
        return jnp.dtype(a.dtype).itemsize

    cost = pl.CostEstimate(
        flops=2 * B * (F_in * HID + HID * H),
        transcendentals=0,
        bytes_accessed=(B * F_in * esz(pose) + F_in * HID * esz(w1)
                        + HID * esz(b1) + HID * H * esz(w2) + H * esz(b2)
                        + B * H * jnp.dtype(out_dtype).itemsize),
    )

    return pl.pallas_call(
        _pos_emb_kernel,
        out_shape=jax.ShapeDtypeStruct((B, H), out_dtype),
        grid=grid,
        in_specs=[
            pl.BlockSpec((tb, F_in), lambda i: (i, 0)),    # pose tile (pipelined)
            pl.BlockSpec((F_in, HID), lambda i: (0, 0)),   # w1 (VMEM-resident)
            pl.BlockSpec((1, HID), lambda i: (0, 0)),      # b1 (resident)
            pl.BlockSpec((HID, H), lambda i: (0, 0)),      # w2 (resident, unpadded)
            pl.BlockSpec((1, H), lambda i: (0, 0)),        # b2 (resident, unpadded)
        ],
        out_specs=pl.BlockSpec((tb, H), lambda i: (i, 0)),  # native H: no writeback inflation
        compiler_params=pltpu.CompilerParams(
            dimension_semantics=("parallel",),
            vmem_limit_bytes=vmem_limit,
        ),
        cost_estimate=cost,
    )(pose, w1, b1, w2, b2)


@functools.partial(
    jax.jit,
    static_argnames=("block_b", "min_rows_for_pallas", "use_bf16_matmul"))
def position_embedding(pose, w1, b1, w2, b2, *, block_b=None,
                       min_rows_for_pallas=256, use_bf16_matmul=False):
    """Dispatcher: tiny batches are launch-overhead dominated -> plain XLA fusion."""
    B = pose.shape[0]
    if B < min_rows_for_pallas:
        h = _leaky_relu(jnp.dot(pose, w1, preferred_element_type=jnp.float32)
                        + b1.astype(jnp.float32))
        y = _leaky_relu(jnp.dot(h.astype(w2.dtype), w2,
                                preferred_element_type=jnp.float32)
                        + b2.astype(jnp.float32))
        return y.astype(pose.dtype)
    return position_embedding_pallas(pose, w1, b1, w2, b2, block_b=block_b,
                                     use_bf16_matmul=use_bf16_matmul)


def init_params(key, in_features, n_hidden, dtype=jnp.float32):
    """Deterministic synthetic init (Kaiming-uniform-like bounds, as nn.Linear)."""
    k1, k2, k3, k4 = jax.random.split(key, 4)
    bound1 = 1.0 / jnp.sqrt(in_features)
    bound2 = 1.0 / jnp.sqrt(HID)
    # weights stored already transposed to (in, out) for the kernel
    w1 = jax.random.uniform(k1, (in_features, HID), dtype, -bound1, bound1)
    b1 = jax.random.uniform(k2, (1, HID), dtype, -bound1, bound1)
    w2 = jax.random.uniform(k3, (HID, n_hidden), dtype, -bound2, bound2)
    b2 = jax.random.uniform(k4, (1, n_hidden), dtype, -bound2, bound2)
    return w1, b1, w2, b2


def reference(pose, w1, b1, w2, b2):
    h = jnp.maximum(pose @ w1 + b1, NEG_SLOPE * (pose @ w1 + b1))
    y = h @ w2 + b2
    return jnp.maximum(y, NEG_SLOPE * y)


if __name__ == "__main__":
    key = jax.random.PRNGKey(0)
    k_x, k_p, k_x2 = jax.random.split(key, 3)

    B, IN_FEATURES, N_HIDDEN = 8, 16, 32
    pose = jax.random.normal(k_x, (B, IN_FEATURES), jnp.float32)
    w1, b1, w2, b2 = init_params(k_p, IN_FEATURES, N_HIDDEN)

    # Exercise the Pallas kernel directly (small shapes, single tile).
    out = jax.block_until_ready(position_embedding_pallas(pose, w1, b1, w2, b2))
    ref = reference(pose, w1, b1, w2, b2)
    assert out.shape == (B, N_HIDDEN)
    assert jnp.allclose(out, ref, atol=1e-5, rtol=1e-5), "pallas mismatch vs reference"

    # Multi-tile, ragged-last-tile path (no batch padding, no H padding).
    B2 = 300
    pose2 = jax.random.normal(k_x2, (B2, IN_FEATURES), jnp.float32)
    out2 = jax.block_until_ready(
        position_embedding_pallas(pose2, w1, b1, w2, b2, block_b=128))
    ref2 = reference(pose2, w1, b1, w2, b2)
    assert out2.shape == (B2, N_HIDDEN)
    assert jnp.allclose(out2, ref2, atol=1e-5, rtol=1e-5), "tiled mismatch vs reference"

    # bf16-fed MXU path (f32 accumulate) — looser tolerance vs the f32 reference.
    out_bf = jax.block_until_ready(
        position_embedding_pallas(pose2, w1, b1, w2, b2, block_b=128,
                                  use_bf16_matmul=True))
    assert out_bf.shape == (B2, N_HIDDEN)
    assert jnp.allclose(out_bf, ref2, atol=5e-2, rtol=5e-2), "bf16 mismatch vs reference"

    # Dispatcher sanity (tiny batch -> pure-XLA path).
    out3 = jax.block_until_ready(position_embedding(pose, w1, b1, w2, b2))
    assert jnp.allclose(out3, ref, atol=1e-5, rtol=1e-5), "dispatch mismatch vs reference"

    print("KERNEL_OK")
</pallas_src>

<mosaic_0001>
module attributes {stable_mosaic.version = 11 : i64} {
  func.func @_pos_emb_kernel(%arg0: i32, %arg1: memref<8x16xf32, #tpu.memory_space<vmem>>, %arg2: memref<16x128xf32, #tpu.memory_space<vmem>>, %arg3: memref<1x128xf32, #tpu.memory_space<vmem>>, %arg4: memref<128x32xf32, #tpu.memory_space<vmem>>, %arg5: memref<1x32xf32, #tpu.memory_space<vmem>>, %arg6: memref<8x32xf32, #tpu.memory_space<vmem>>) attributes {dimension_semantics = [#tpu.dimension_semantics<parallel>], iteration_bounds = array<i64: 1>, scalar_prefetch = 0 : i64, scratch_operands = 0 : i64, tpu.core_type = #tpu.core_type<tc>, window_params = [{transform_indices = @transform_0, window_bounds = array<i64: 8, 16>}, {pipeline_mode = #tpu.pipeline_mode<synchronous>, transform_indices = @transform_1, window_bounds = array<i64: 16, 128>}, {pipeline_mode = #tpu.pipeline_mode<synchronous>, transform_indices = @transform_2, window_bounds = array<i64: 1, 128>}, {pipeline_mode = #tpu.pipeline_mode<synchronous>, transform_indices = @transform_3, window_bounds = array<i64: 128, 32>}, {pipeline_mode = #tpu.pipeline_mode<synchronous>, transform_indices = @transform_4, window_bounds = array<i64: 1, 32>}, {transform_indices = @transform_5, window_bounds = array<i64: 8, 32>}]} {
    %c0 = arith.constant 0 : index
    %c0_0 = arith.constant 0 : index
    %0 = vector.load %arg1[%c0, %c0_0] : memref<8x16xf32, #tpu.memory_space<vmem>>, vector<8x16xf32>
    %c0_1 = arith.constant 0 : index
    %c0_2 = arith.constant 0 : index
    %1 = vector.load %arg2[%c0_1, %c0_2] : memref<16x128xf32, #tpu.memory_space<vmem>>, vector<16x128xf32>
    %cst = arith.constant dense<0.000000e+00> : vector<8x128xf32>
    %2 = tpu.matmul %0, %1, %cst {dimension_numbers = #tpu.dot_dimension_numbers<[1], [0], [0], [1], [0, 0, 1, 1], [], []>} : vector<8x16xf32>, vector<16x128xf32>, vector<8x128xf32> -> vector<8x128xf32>
    %c0_3 = arith.constant 0 : index
    %c0_4 = arith.constant 0 : index
    %3 = vector.load %arg3[%c0_3, %c0_4] : memref<1x128xf32, #tpu.memory_space<vmem>>, vector<1x128xf32>
    %4 = vector.broadcast %3 : vector<1x128xf32> to vector<8x128xf32>
    %5 = arith.addf %2, %4 : vector<8x128xf32>
    %cst_5 = arith.constant 0.00999999977 : f32
    %6 = vector.broadcast %cst_5 : f32 to vector<8x128xf32>
    %7 = arith.mulf %6, %5 : vector<8x128xf32>
    %8 = arith.maximumf %5, %7 : vector<8x128xf32>
    %c0_6 = arith.constant 0 : index
    %c0_7 = arith.constant 0 : index
    %9 = vector.load %arg4[%c0_6, %c0_7] : memref<128x32xf32, #tpu.memory_space<vmem>>, vector<128x32xf32>
    %cst_8 = arith.constant dense<0.000000e+00> : vector<8x32xf32>
    %10 = tpu.matmul %8, %9, %cst_8 {dimension_numbers = #tpu.dot_dimension_numbers<[1], [0], [0], [1], [0, 0, 1, 1], [], []>} : vector<8x128xf32>, vector<128x32xf32>, vector<8x32xf32> -> vector<8x32xf32>
    %c0_9 = arith.constant 0 : index
    %c0_10 = arith.constant 0 : index
    %11 = vector.load %arg5[%c0_9, %c0_10] : memref<1x32xf32, #tpu.memory_space<vmem>>, vector<1x32xf32>
    %12 = vector.broadcast %11 : vector<1x32xf32> to vector<8x32xf32>
    %13 = arith.addf %10, %12 : vector<8x32xf32>
    %cst_11 = arith.constant 0.00999999977 : f32
    %14 = vector.broadcast %cst_11 : f32 to vector<8x32xf32>
    %15 = arith.mulf %14, %13 : vector<8x32xf32>
    %16 = arith.maximumf %13, %15 : vector<8x32xf32>
    %c0_12 = arith.constant 0 : index
    %c0_13 = arith.constant 0 : index
    %17 = vector.load %arg6[%c0_12, %c0_13] : memref<8x32xf32, #tpu.memory_space<vmem>>, vector<8x32xf32>
    tpu.vector_store %arg6[%c0_12, %c0_13], %16 {strides = array<i32>} : memref<8x32xf32, #tpu.memory_space<vmem>>, vector<8x32xf32>,
    return
  }
  func.func @transform_0(%arg0: i32) -> (i32, i32) {
    %c0_i32 = arith.constant 0 : i32
    %c0_i32_0 = arith.constant 0 : i32
    return %arg0, %c0_i32 : i32, i32
  }
  func.func @transform_1(%arg0: i32) -> (i32, i32) {
    %c0_i32 = arith.constant 0 : i32
    %c0_i32_0 = arith.constant 0 : i32
    %c0_i32_1 = arith.constant 0 : i32
    return %c0_i32, %c0_i32_0 : i32, i32
  }
  func.func @transform_2(%arg0: i32) -> (i32, i32) {
    %c0_i32 = arith.constant 0 : i32
    %c0_i32_0 = arith.constant 0 : i32
    %c0_i32_1 = arith.constant 0 : i32
    return %c0_i32, %c0_i32_0 : i32, i32
  }
  func.func @transform_3(%arg0: i32) -> (i32, i32) {
    %c0_i32 = arith.constant 0 : i32
    %c0_i32_0 = arith.constant 0 : i32
    %c0_i32_1 = arith.constant 0 : i32
    return %c0_i32, %c0_i32_0 : i32, i32
  }
  func.func @transform_4(%arg0: i32) -> (i32, i32) {
    %c0_i32 = arith.constant 0 : i32
    %c0_i32_0 = arith.constant 0 : i32
    %c0_i32_1 = arith.constant 0 : i32
    return %c0_i32, %c0_i32_0 : i32, i32
  }
  func.func @transform_5(%arg0: i32) -> (i32, i32) {
    %c0_i32 = arith.constant 0 : i32
    %c0_i32_0 = arith.constant 0 : i32
    return %arg0, %c0_i32 : i32, i32
  }
}

</mosaic_0001>

<llo_original>
// kernel: position_embedding_pallas.1
$region0: #{position_embedding_pallas.1}
  #allocation0 [shape = 'u32[]', space=smem, size = 0x4, offset = 0x4, fixed_abs, tag = 'smem constant byte address 0x4 - core index']
  #allocation1 [shape = 'u32[72,128]{1,0:T(1,128)}', space=vmem, size = 0x9000, scoped, tag = 'internal scratch']
  %s0 = inlined_call_operand.vmem [shape: f32[8,16], index: 0, kind: input, shape index: {}]
  %s1 = inlined_call_operand.vmem [shape: f32[16,128], index: 1, kind: input, shape index: {}]
  %s2 = inlined_call_operand.vmem [shape: f32[1,128], index: 2, kind: input, shape index: {}]
  %s3 = inlined_call_operand.vmem [shape: f32[128,32], index: 3, kind: input, shape index: {}]
  %s4 = inlined_call_operand.vmem [shape: f32[1,32], index: 4, kind: input, shape index: {}]
  %s5 = inlined_call_operand.hbm [shape: f32[8,32], index: 5, kind: output, shape index: {}]
  %s6 = sld [smem:[#allocation0]]
  $region30: #{position_embedding_pallas.1} parent=0
    _
  %s8 = ssub.s32 1, %s6
  %s9 = scalar_select 0, %s8, %s6
  $region1: #{position_embedding_pallas.1} parent=0
    #allocation2 [shape = 'u8[4096]{0}', space=vmem, size = 0x1000, scoped, tag = 'output window, operand 0, single buffered']
    #allocation3 [shape = 's32[1]{0}', space=sflag, size = 0x4, scoped, tag = 'scoped memory for position_embedding_pallas.1']
    %10 = vsyncpa [#allocation3], 0
    // Predicated region
    $region2: #{position_embedding_pallas.1} parent=1 // pred_check
      _
    $region3: #{position_embedding_pallas.1} parent=1 // pred_check_branch
      %12 = sbr.rel (0) target = $region5
    $region4: #{position_embedding_pallas.1} parent=1 // pred_region
      _
    $region5: #{position_embedding_pallas.1} parent=1 // pred_fallthru
      _
    // Predicated region
    $region6: #{position_embedding_pallas.1} parent=1 // pred_check
      _
    $region7: #{position_embedding_pallas.1} parent=1 // pred_check_branch
      %14 = sbr.rel (0) target = $region9
    $region8: #{position_embedding_pallas.1} parent=1 // pred_region
      _
    $region9: #{position_embedding_pallas.1} parent=1 // pred_fallthru
      _
    // Predicated region
    $region10: #{position_embedding_pallas.1} parent=1 // pred_check
      _
    $region11: #{position_embedding_pallas.1} parent=1 // pred_check_branch
      %16 = sbr.rel (0) target = $region13
    $region12: #{position_embedding_pallas.1} parent=1 // pred_region
      _
    $region13: #{position_embedding_pallas.1} parent=1 // pred_fallthru
      _
    // Predicated region
    $region14: #{position_embedding_pallas.1} parent=1 // pred_check
      _
    $region15: #{position_embedding_pallas.1} parent=1 // pred_check_branch
      %18 = sbr.rel (0) target = $region17
    $region16: #{position_embedding_pallas.1} parent=1 // pred_region
      _
    $region17: #{position_embedding_pallas.1} parent=1 // pred_fallthru
      _
    // Predicated region
    $region18: #{position_embedding_pallas.1} parent=1 // pred_check
      _
    $region19: #{position_embedding_pallas.1} parent=1 // pred_check_branch
      %20 = sbr.rel (0) target = $region21
    $region20: #{position_embedding_pallas.1} parent=1 // pred_region
      _
    $region21: #{position_embedding_pallas.1} parent=1 // pred_fallthru
      _
    %v21 = vld [vmem:[%s0] sm:$0xff]
    %v22 = vld [vmem:[%s1] sm:$0xff]
    %v23 = vld [vmem:[%s1 + $0x8] sm:$0xff]
    %v24 = vld [vmem:[%s2] sm:$0x1]
    %v26 = vperm.slane %v24, 0
    %vm28 = vcmask 130048
    %v30 = vsel %vm28, %v21, 0
    %32 = vmatpush.msra.mxu0 0.0
    %33 = vmatpush.msra.mxu0 0.0
    %34 = vmatpush.msra.mxu0 0.0
    %35 = vmatpush.msra.mxu0 0.0
    %36 = vmatpush.msra.mxu0 0.0
    %37 = vmatpush.msra.mxu0 0.0
    %38 = vmatpush.msra.mxu0 0.0
    %39 = vmatpush.msra.mxu0 0.0
    %40 = vmatpush.msra.mxu0 0.0
    %41 = vmatpush.msra.mxu0 0.0
    %42 = vmatpush.msra.mxu0 0.0
    %43 = vmatpush.msra.mxu0 0.0
    %44 = vmatpush.msra.mxu0 0.0
    %45 = vmatpush.msra.mxu0 0.0
    %46 = vmatpush.msra.mxu0 %v23
    %47 = vmatpush.msra.mxu0 %v22
    %48 = vmatmul.f32.gmra.mxu0 %v30
    %v49 = vpop.f32.mrf.mxu0
    %v50 = vadd.f32 %v26, %v49
    %51 = vdwg.mxu0
    %v52 = vmul.f32 %v50, 0.01
    %v53 = vmax.f32 %v50, %v52
    %v54 = vld [vmem:[%s3] sm:$0xff]
    %v55 = vld [vmem:[%s3 + $0x8] sm:$0xff]
    %v56 = vld [vmem:[%s3 + $0x10] sm:$0xff]
    %v57 = vld [vmem:[%s3 + $0x18] sm:$0xff]
    %v58 = vld [vmem:[%s3 + $0x20] sm:$0xff]
    %v59 = vld [vmem:[%s3 + $0x28] sm:$0xff]
    %v60 = vld [vmem:[%s3 + $0x30] sm:$0xff]
    %v61 = vld [vmem:[%s3 + $0x38] sm:$0xff]
    %v62 = vld [vmem:[%s3 + $0x40] sm:$0xff]
    %v63 = vld [vmem:[%s3 + $0x48] sm:$0xff]
    %v64 = vld [vmem:[%s3 + $0x50] sm:$0xff]
    %v65 = vld [vmem:[%s3 + $0x58] sm:$0xff]
    %v66 = vld [vmem:[%s3 + $0x60] sm:$0xff]
    %v67 = vld [vmem:[%s3 + $0x68] sm:$0xff]
    %v68 = vld [vmem:[%s3 + $0x70] sm:$0xff]
    %v69 = vld [vmem:[%s3 + $0x78] sm:$0xff]
    %v70 = vld [vmem:[%s4] sm:$0x1]
    %v72 = vperm.slane %v70, 0
    %74 = vmatpush.msra.mxu0 %v69
    %75 = vmatpush.msra.mxu0 %v68
    %76 = vmatpush.msra.mxu0 %v67
    %77 = vmatpush.msra.mxu0 %v66
    %78 = vmatpush.msra.mxu0 %v65
    %79 = vmatpush.msra.mxu0 %v64
    %80 = vmatpush.msra.mxu0 %v63
    %81 = vmatpush.msra.mxu0 %v62
    %82 = vmatpush.msra.mxu0 %v61
    %83 = vmatpush.msra.mxu0 %v60
    %84 = vmatpush.msra.mxu0 %v59
    %85 = vmatpush.msra.mxu0 %v58
    %86 = vmatpush.msra.mxu0 %v57
    %87 = vmatpush.msra.mxu0 %v56
    %88 = vmatpush.msra.mxu0 %v55
    %89 = vmatpush.msra.mxu0 %v54
    %90 = vmatmul.f32.gmra.mxu0 %v53
    %v91 = vpop.f32.mrf.mxu0
    %v92 = vadd.f32 %v72, %v91
    %93 = vdwg.mxu0
    %v94 = vmul.f32 %v92, 0.01
    %v95 = vmax.f32 %v92, %v94
    %vm96 = vcmask 261120
    %97 = vst.msk [vmem:[#allocation2] sm:$0xff] %vm96, %v95
    // Predicated region
    $region22: #{position_embedding_pallas.1} parent=1 // pred_check
      _
    $region23: #{position_embedding_pallas.1} parent=1 // pred_check_branch
      %99 = sbr.rel (0) target = $region25
    $region24: #{position_embedding_pallas.1} parent=1 // pred_region
      %101 = vsyncadd [#allocation3], 0
      %s103 = sshll.u32 [#allocation2], 4
      %s104 = int_to_ptr.vmem [resolvable:$true] %s103
      %s105 = sshll.u32 %s5, 4
      %s106 = int_to_ptr.hbm [resolvable:$true] %s105
      %108 = dma.vmem_to_hbm [thread:$0]  %s104, 128, %s106, [#allocation3]
    $region25: #{position_embedding_pallas.1} parent=1 // pred_fallthru
      _
    // Predicated region
    $region26: #{position_embedding_pallas.1} parent=1 // pred_check
      _
    $region27: #{position_embedding_pallas.1} parent=1 // pred_check_branch
      %110 = sbr.rel (0) target = $region29
    $region28: #{position_embedding_pallas.1} parent=1 // pred_region
      %112 = dma.done [#allocation3], 128
    $region29: #{position_embedding_pallas.1} parent=1 // pred_fallthru
      _
    %113 = vsyncpa [#allocation3], 1

</llo_original>
